<compile_context>
chip_gen: v5e
topology: v5e:2x2
jax: 0.10.0
libtpu: 0.0.40
codegen_flags: <defaults>
</compile_context>

<pallas_src>
from typing import NamedTuple

import jax
import jax.numpy as jnp
from jax.experimental import pallas as pl
from jax.experimental.pallas import tpu as pltpu


# --------------------------------------------------------------------------- #
# small helpers
# --------------------------------------------------------------------------- #
def _round_up(n, m):
    return ((n + m - 1) // m) * m


def _cdiv(a, b):
    return (a + b - 1) // b


_VMEM_CAP = None


def _vmem_capacity_bytes():
    """Per-core VMEM capacity; conservative 64 MiB fallback if the query fails."""
    global _VMEM_CAP
    if _VMEM_CAP is None:
        cap = 64 * 2 ** 20
        info_fn = getattr(pltpu, "get_tpu_info", None)
        if info_fn is not None:
            try:
                cap = int(getattr(info_fn(), "vmem_capacity_bytes", cap))
            except Exception:  # hardware query unavailable -> conservative cap
                cap = 64 * 2 ** 20
        _VMEM_CAP = cap
    return _VMEM_CAP


_BUFFERED_OK = None


def _buffered_supported():
    """One-time capability check for pipeline_mode=pl.Buffered (TypeError only)."""
    global _BUFFERED_OK
    if _BUFFERED_OK is None:
        if not hasattr(pl, "Buffered"):
            _BUFFERED_OK = False
        else:
            try:
                pl.BlockSpec((8, 128), lambda i: (0, 0),
                             pipeline_mode=pl.Buffered(1))
                _BUFFERED_OK = True
            except TypeError:
                _BUFFERED_OK = False
    return _BUFFERED_OK


def _vmem_estimate(tb, d_in, th, nh, d_out_p, cbytes, out_bytes, wbuf):
    """Resident-VMEM estimate (per core) for one pipelined step."""
    est = 2 * tb * d_in * 4                                  # x tiles (f32, dbl-buf)
    est += 2 * tb * d_out_p * out_bytes                      # out tiles (dbl-buf)
    est += tb * d_out_p * 4                                  # f32 accumulator scratch
    est += wbuf * (d_in * th + th * d_out_p) * cbytes        # w1/w2 chunk(s)
    est += wbuf * th * 4 + d_out_p * 4                       # b1 chunk(s), b2
    est += tb * th * (4 + cbytes)                            # h (f32) + compute-dtype copy
    est += tb * d_out_p * 4                                  # 2nd-dot result before acc add
    return est


# --------------------------------------------------------------------------- #
# kernel
# --------------------------------------------------------------------------- #
def _mlp_kernel(x_ref, w1_ref, b1_ref, w2_ref, b2_ref, o_ref, acc_ref):
    j = pl.program_id(1)                       # hidden-chunk (reduction) axis

    @pl.when(j == 0)
    def _init():
        acc_ref[...] = jnp.zeros_like(acc_ref)

    # Layer 1: cast the f32 x tile to the compute dtype on the VPU (hidden
    # under the MXU work), matmul with f32 accumulation, bias + LeakyReLU.
    xb = x_ref[...].astype(w1_ref.dtype)
    h = jnp.dot(xb, w1_ref[...], preferred_element_type=jnp.float32)
    h = h + b1_ref[...]
    h = jnp.maximum(h, 0.2 * h)                # LeakyReLU(negative_slope=0.2)

    # Layer 2 partial product for this hidden chunk, accumulated in f32 VMEM.
    acc_ref[...] += jnp.dot(h.astype(w2_ref.dtype), w2_ref[...],
                            preferred_element_type=jnp.float32)

    @pl.when(j == pl.num_programs(1) - 1)
    def _finish():
        o_ref[...] = (acc_ref[...] + b2_ref[...]).astype(o_ref.dtype)


# --------------------------------------------------------------------------- #
# parameter preparation (one-time cast / pad, hoisted out of the call path)
# --------------------------------------------------------------------------- #
class MLPParams(NamedTuple):
    w1: jax.Array        # [D_in, D_hid_p]   compute dtype
    b1: jax.Array        # [1, D_hid_p]      f32
    w2: jax.Array        # [D_hid_p, D_out_p] compute dtype
    b2: jax.Array        # [1, D_out_p]      f32
    d_in: int
    d_hid: int
    d_out: int
    hid_tile: int        # hidden-dim chunk processed per grid step


def prepare_params(w1, b1, w2, b2, *, compute_dtype=jnp.bfloat16, batch_tile=None):
    """Cast + lane-pad weights/biases once.

    w1: [D_in, D_hid]; b1: [D_hid] or [1, D_hid]; w2: [D_hid, D_out];
    b2: [D_out] or [1, D_out].  Weights are stored pre-transposed ([in, out])
    vs. torch's [out, in], so the kernel computes x @ W + b (same math).
    """
    d_in, d_hid = w1.shape
    d_out = w2.shape[1]
    cbytes = jnp.dtype(compute_dtype).itemsize

    cap = _vmem_capacity_bytes()
    if batch_tile is None:
        batch_tile = 1024 if cap >= 96 * 2 ** 20 else 512
    tb_est = _round_up(batch_tile, 16)

    # Lane-dense padding (zero pads are mathematically inert).
    # TODO(synk): pad to 256 on v6e/v7x when D_hid/D_out are large (2x256 MXU).
    d_out_p = _round_up(d_out, 128)

    # Pick the hidden-dim chunk so one pipelined step fits comfortably in VMEM.
    budget = int(0.55 * cap)
    wbuf_single = 1 if _buffered_supported() else 2
    th = _round_up(max(d_hid, 1), 128)
    while th > 128:
        nh = _cdiv(_round_up(d_hid, 128), th)
        wbuf = wbuf_single if nh == 1 else 2
        if _vmem_estimate(tb_est, d_in, th, nh, d_out_p, cbytes, 4, wbuf) <= budget:
            break
        th = _round_up(_cdiv(th, 2), 128)
    d_hid_p = _cdiv(_round_up(d_hid, 128), th) * th

    w1c = jnp.pad(jnp.asarray(w1).astype(compute_dtype),
                  ((0, 0), (0, d_hid_p - d_hid)))
    b1c = jnp.pad(jnp.asarray(b1, jnp.float32).reshape(1, -1),
                  ((0, 0), (0, d_hid_p - d_hid)))
    w2c = jnp.pad(jnp.asarray(w2).astype(compute_dtype),
                  ((0, d_hid_p - d_hid), (0, d_out_p - d_out)))
    b2c = jnp.pad(jnp.asarray(b2, jnp.float32).reshape(1, -1),
                  ((0, 0), (0, d_out_p - d_out)))
    return MLPParams(w1c, b1c, w2c, b2c, d_in, d_hid, d_out, th)


# --------------------------------------------------------------------------- #
# forward
# --------------------------------------------------------------------------- #
def mlp_forward(x, params: MLPParams, *, batch_tile=None, out_dtype=None):
    """Linear(D_in -> D_in//2) -> LeakyReLU(0.2) -> Linear(-> D_out)."""
    B, d_in = x.shape
    if d_in != params.d_in:
        raise ValueError(f"x feature dim {d_in} != prepared D_in {params.d_in}")

    d_hid_p = params.w1.shape[1]
    d_out_p = params.w2.shape[1]
    th = params.hid_tile
    nh = d_hid_p // th
    out_dtype = x.dtype if out_dtype is None else jnp.dtype(out_dtype)
    out_bytes = jnp.dtype(out_dtype).itemsize
    cbytes = params.w1.dtype.itemsize
    cap = _vmem_capacity_bytes()

    # ---- batch tile: >= 2 grid steps when B permits (megacore + pipelining) --
    if batch_tile is None:
        batch_tile = 1024 if cap >= 96 * 2 ** 20 else 512
    tb = _round_up(min(batch_tile, max(_cdiv(B, 2), 16)), 16)
    B_p = _round_up(B, tb)
    xr = x if B_p == B else jnp.pad(x, ((0, B_p - B), (0, 0)))  # rare ragged case
    # Note: x keeps its native dtype; the bf16 cast happens inside the kernel.
    # D_in is left unpadded (block equals the full dim) to avoid an extra HBM
    # pass over x; zero K-padding would only improve MXU K-fill for odd D_in.

    # ---- VMEM limit from the (single-counted) resident-tile estimate ---------
    wbuf = 1 if (nh == 1 and _buffered_supported()) else 2
    est = _vmem_estimate(tb, d_in, th, nh, d_out_p, cbytes, out_bytes, wbuf)
    vmem_limit = int(min(int(0.85 * cap), max(int(1.5 * est), 32 * 2 ** 20)))

    const_kw = {"pipeline_mode": pl.Buffered(1)} if _buffered_supported() else {}
    w_kw = const_kw if nh == 1 else {}   # stream (double-buffer) weight chunks if nh > 1

    grid = (B_p // tb, nh)
    y_p = pl.pallas_call(
        _mlp_kernel,
        out_shape=jax.ShapeDtypeStruct((B_p, d_out_p), out_dtype),
        grid_spec=pltpu.PrefetchScalarGridSpec(
            num_scalar_prefetch=0,
            grid=grid,
            in_specs=[
                pl.BlockSpec((tb, d_in), lambda i, j: (i, 0)),
                pl.BlockSpec((d_in, th), lambda i, j: (0, j), **w_kw),
                pl.BlockSpec((1, th), lambda i, j: (0, j), **w_kw),
                pl.BlockSpec((th, d_out_p), lambda i, j: (j, 0), **w_kw),
                pl.BlockSpec((1, d_out_p), lambda i, j: (0, 0), **const_kw),
            ],
            out_specs=pl.BlockSpec((tb, d_out_p), lambda i, j: (i, 0)),
            scratch_shapes=[pltpu.VMEM((tb, d_out_p), jnp.float32)],
        ),
        compiler_params=pltpu.CompilerParams(
            dimension_semantics=("parallel", "arbitrary"),
            vmem_limit_bytes=vmem_limit,
        ),
    )(xr, params.w1, params.b1, params.w2, params.b2)

    # TODO(synk): for tiny D_out (e.g. 16) a masked store to an unpadded D_out
    # would cut the padded writeback; kept lane-dense (128-wide) stores for now.
    return y_p[:B, :params.d_out]


# --------------------------------------------------------------------------- #
# init + demo
# --------------------------------------------------------------------------- #
def init_params(key, input_dim, output_dim, dtype=jnp.float32):
    """Deterministic synthetic init matching nn.Linear shapes.

    PyTorch Linear stores weight as [out, in]; we store the transpose [in, out]
    so the kernel does x @ W + b (same math).
    """
    hidden = input_dim // 2
    k1, k2, k3, k4 = jax.random.split(key, 4)
    bound1 = 1.0 / (input_dim ** 0.5)
    bound2 = 1.0 / (hidden ** 0.5)
    w1 = jax.random.uniform(k1, (input_dim, hidden), dtype, -bound1, bound1)
    b1 = jax.random.uniform(k2, (1, hidden), dtype, -bound1, bound1)
    w2 = jax.random.uniform(k3, (hidden, output_dim), dtype, -bound2, bound2)
    b2 = jax.random.uniform(k4, (1, output_dim), dtype, -bound2, bound2)
    return w1, b1, w2, b2


if __name__ == "__main__":
    key = jax.random.PRNGKey(0)
    batch, input_dim, output_dim = 256, 64, 16   # small; grid still has 2 batch steps

    kx, kp = jax.random.split(key)
    x = jax.random.normal(kx, (batch, input_dim), jnp.float32)
    w1, b1, w2, b2 = init_params(kp, input_dim, output_dim)

    params = prepare_params(w1, b1, w2, b2)      # one-time cast/pad (hoisted)
    out = mlp_forward(x, params)
    out = jax.block_until_ready(out)
    assert out.shape == (batch, output_dim)
    assert out.dtype == x.dtype

    # Reference 1: exact module math in f32 (loose tol -> bf16 operand drift).
    h32 = x @ w1 + b1
    h32 = jnp.where(h32 >= 0.0, h32, 0.2 * h32)
    y32 = h32 @ w2 + b2
    # Reference 2: same bf16-operand / f32-accumulate recipe as the kernel.
    xb, w1b, w2b = (a.astype(jnp.bfloat16) for a in (x, w1, w2))
    hb = jnp.dot(xb, w1b, preferred_element_type=jnp.float32) + b1
    hb = jnp.maximum(hb, 0.2 * hb)
    yb = jnp.dot(hb.astype(jnp.bfloat16), w2b, preferred_element_type=jnp.float32) + b2

    assert jnp.allclose(out, yb.astype(out.dtype), atol=1e-2, rtol=1e-2), "bf16 recipe mismatch"
    assert jnp.allclose(out, y32, atol=5e-2, rtol=5e-2), "f32 reference mismatch"

    print("KERNEL_OK")
</pallas_src>

<mosaic_0001>
module attributes {stable_mosaic.version = 11 : i64} {
  func.func @_mlp_kernel(%arg0: i32, %arg1: i32, %arg2: memref<128x64xf32, #tpu.memory_space<vmem>>, %arg3: memref<64x128xbf16, #tpu.memory_space<vmem>>, %arg4: memref<1x128xf32, #tpu.memory_space<vmem>>, %arg5: memref<128x128xbf16, #tpu.memory_space<vmem>>, %arg6: memref<1x128xf32, #tpu.memory_space<vmem>>, %arg7: memref<128x128xf32, #tpu.memory_space<vmem>>, %arg8: memref<128x128xf32, #tpu.memory_space<vmem>>) attributes {dimension_semantics = [#tpu.dimension_semantics<parallel>, #tpu.dimension_semantics<arbitrary>], iteration_bounds = array<i64: 2, 1>, scalar_prefetch = 0 : i64, scratch_operands = 1 : i64, tpu.core_type = #tpu.core_type<tc>, window_params = [{transform_indices = @transform_0, window_bounds = array<i64: 128, 64>}, {pipeline_mode = #tpu.pipeline_mode<synchronous>, transform_indices = @transform_1, window_bounds = array<i64: 64, 128>}, {pipeline_mode = #tpu.pipeline_mode<synchronous>, transform_indices = @transform_2, window_bounds = array<i64: 1, 128>}, {pipeline_mode = #tpu.pipeline_mode<synchronous>, transform_indices = @transform_3, window_bounds = array<i64: 128, 128>}, {pipeline_mode = #tpu.pipeline_mode<synchronous>, transform_indices = @transform_4, window_bounds = array<i64: 1, 128>}, {transform_indices = @transform_5, window_bounds = array<i64: 128, 128>}]} {
    %c0_i32 = arith.constant 0 : i32
    %0 = arith.cmpi eq, %arg1, %c0_i32 : i32
    %1 = arith.extui %0 : i1 to i32
    %c0_i32_0 = arith.constant 0 : i32
    %2 = arith.cmpi ne, %1, %c0_i32_0 : i32
    scf.if %2 {
      %cst_16 = arith.constant 0.000000e+00 : f32
      %22 = vector.broadcast %cst_16 : f32 to vector<128x128xf32>
      %c0_17 = arith.constant 0 : index
      %c0_18 = arith.constant 0 : index
      %23 = vector.load %arg8[%c0_17, %c0_18] : memref<128x128xf32, #tpu.memory_space<vmem>>, vector<128x128xf32>
      tpu.vector_store %arg8[%c0_17, %c0_18], %22 {strides = array<i32>} : memref<128x128xf32, #tpu.memory_space<vmem>>, vector<128x128xf32>,
    } else {
    }
    %c0 = arith.constant 0 : index
    %c0_1 = arith.constant 0 : index
    %3 = vector.load %arg2[%c0, %c0_1] : memref<128x64xf32, #tpu.memory_space<vmem>>, vector<128x64xf32>
    %4 = arith.truncf %3 : vector<128x64xf32> to vector<128x64xbf16>
    %c0_2 = arith.constant 0 : index
    %c0_3 = arith.constant 0 : index
    %5 = vector.load %arg3[%c0_2, %c0_3] : memref<64x128xbf16, #tpu.memory_space<vmem>>, vector<64x128xbf16>
    %cst = arith.constant dense<0.000000e+00> : vector<128x128xf32>
    %6 = tpu.matmul %4, %5, %cst {dimension_numbers = #tpu.dot_dimension_numbers<[1], [0], [0], [1], [0, 0, 1, 1], [], []>} : vector<128x64xbf16>, vector<64x128xbf16>, vector<128x128xf32> -> vector<128x128xf32>
    %c0_4 = arith.constant 0 : index
    %c0_5 = arith.constant 0 : index
    %7 = vector.load %arg4[%c0_4, %c0_5] : memref<1x128xf32, #tpu.memory_space<vmem>>, vector<1x128xf32>
    %8 = vector.broadcast %7 : vector<1x128xf32> to vector<128x128xf32>
    %9 = arith.addf %6, %8 : vector<128x128xf32>
    %cst_6 = arith.constant 2.000000e-01 : f32
    %10 = vector.broadcast %cst_6 : f32 to vector<128x128xf32>
    %11 = arith.mulf %10, %9 : vector<128x128xf32>
    %12 = arith.maximumf %9, %11 : vector<128x128xf32>
    %c0_7 = arith.constant 0 : index
    %c0_8 = arith.constant 0 : index
    %13 = vector.load %arg8[%c0_7, %c0_8] : memref<128x128xf32, #tpu.memory_space<vmem>>, vector<128x128xf32>
    %14 = arith.truncf %12 : vector<128x128xf32> to vector<128x128xbf16>
    %c0_9 = arith.constant 0 : index
    %c0_10 = arith.constant 0 : index
    %15 = vector.load %arg5[%c0_9, %c0_10] : memref<128x128xbf16, #tpu.memory_space<vmem>>, vector<128x128xbf16>
    %cst_11 = arith.constant dense<0.000000e+00> : vector<128x128xf32>
    %16 = tpu.matmul %14, %15, %cst_11 {dimension_numbers = #tpu.dot_dimension_numbers<[1], [0], [0], [1], [0, 0, 1, 1], [], []>} : vector<128x128xbf16>, vector<128x128xbf16>, vector<128x128xf32> -> vector<128x128xf32>
    %17 = arith.addf %13, %16 : vector<128x128xf32>
    %c0_12 = arith.constant 0 : index
    %c0_13 = arith.constant 0 : index
    %18 = vector.load %arg8[%c0_12, %c0_13] : memref<128x128xf32, #tpu.memory_space<vmem>>, vector<128x128xf32>
    tpu.vector_store %arg8[%c0_12, %c0_13], %17 {strides = array<i32>} : memref<128x128xf32, #tpu.memory_space<vmem>>, vector<128x128xf32>,
    %c0_i32_14 = arith.constant 0 : i32
    %19 = arith.cmpi eq, %arg1, %c0_i32_14 : i32
    %20 = arith.extui %19 : i1 to i32
    %c0_i32_15 = arith.constant 0 : i32
    %21 = arith.cmpi ne, %20, %c0_i32_15 : i32
    scf.if %21 {
      %c0_16 = arith.constant 0 : index
      %c0_17 = arith.constant 0 : index
      %22 = vector.load %arg8[%c0_16, %c0_17] : memref<128x128xf32, #tpu.memory_space<vmem>>, vector<128x128xf32>
      %c0_18 = arith.constant 0 : index
      %c0_19 = arith.constant 0 : index
      %23 = vector.load %arg6[%c0_18, %c0_19] : memref<1x128xf32, #tpu.memory_space<vmem>>, vector<1x128xf32>
      %24 = vector.broadcast %23 : vector<1x128xf32> to vector<128x128xf32>
      %25 = arith.addf %22, %24 : vector<128x128xf32>
      %c0_20 = arith.constant 0 : index
      %c0_21 = arith.constant 0 : index
      %26 = vector.load %arg7[%c0_20, %c0_21] : memref<128x128xf32, #tpu.memory_space<vmem>>, vector<128x128xf32>
      tpu.vector_store %arg7[%c0_20, %c0_21], %25 {strides = array<i32>} : memref<128x128xf32, #tpu.memory_space<vmem>>, vector<128x128xf32>,
    } else {
    }
    return
  }
  func.func @transform_0(%arg0: i32, %arg1: i32) -> (i32, i32) {
    %c0_i32 = arith.constant 0 : i32
    %c0_i32_0 = arith.constant 0 : i32
    return %arg0, %c0_i32 : i32, i32
  }
  func.func @transform_1(%arg0: i32, %arg1: i32) -> (i32, i32) {
    %c0_i32 = arith.constant 0 : i32
    %c0_i32_0 = arith.constant 0 : i32
    return %c0_i32, %arg1 : i32, i32
  }
  func.func @transform_2(%arg0: i32, %arg1: i32) -> (i32, i32) {
    %c0_i32 = arith.constant 0 : i32
    %c0_i32_0 = arith.constant 0 : i32
    return %c0_i32, %arg1 : i32, i32
  }
  func.func @transform_3(%arg0: i32, %arg1: i32) -> (i32, i32) {
    %c0_i32 = arith.constant 0 : i32
    %c0_i32_0 = arith.constant 0 : i32
    return %arg1, %c0_i32 : i32, i32
  }
  func.func @transform_4(%arg0: i32, %arg1: i32) -> (i32, i32) {
    %c0_i32 = arith.constant 0 : i32
    %c0_i32_0 = arith.constant 0 : i32
    %c0_i32_1 = arith.constant 0 : i32
    return %c0_i32, %c0_i32_0 : i32, i32
  }
  func.func @transform_5(%arg0: i32, %arg1: i32) -> (i32, i32) {
    %c0_i32 = arith.constant 0 : i32
    %c0_i32_0 = arith.constant 0 : i32
    return %arg0, %c0_i32 : i32, i32
  }
}

</mosaic_0001>

<llo_original>
// kernel: tpu_custom_call.1
$region0: #{tpu_custom_call.1}
  #allocation0 [shape = 'u32[]', space=smem, size = 0x4, offset = 0x4, fixed_abs, tag = 'smem constant byte address 0x4 - core index']
  #allocation1 [shape = 'u32[72,128]{1,0:T(1,128)}', space=vmem, size = 0x9000, scoped, tag = 'internal scratch']
  #allocation2 [shape = 'f32[128,128]{1,0:T(8,128)}', space=vmem, size = 0x10000, scoped, tag = 'scratch operand']
  %s0 = inlined_call_operand.vmem [shape: f32[256,64], index: 0, kind: input, shape index: {}]
  %s1 = inlined_call_operand.vmem [shape: bf16[64,128], index: 1, kind: input, shape index: {}]
  %s2 = inlined_call_operand.vmem [shape: f32[1,128], index: 2, kind: input, shape index: {}]
  %s3 = inlined_call_operand.vmem [shape: bf16[128,128], index: 3, kind: input, shape index: {}]
  %s4 = inlined_call_operand.vmem [shape: f32[1,128], index: 4, kind: input, shape index: {}]
  %s5 = inlined_call_operand.hbm [shape: f32[256,128], index: 5, kind: output, shape index: {}]
  %s6 = sld [smem:[#allocation0]]
  $region61: #{tpu_custom_call.1} parent=0
    _
  %s8 = ssub.s32 1, %s6
  %s9 = scalar_select 0, %s8, %s6
  $region1: #{tpu_custom_call.1} parent=0
    #allocation3 [shape = 'u8[131072]{0}', space=vmem, size = 0x20000, scoped, tag = 'output window, operand 0']
    #allocation4 [shape = 's32[2]{0}', space=sflag, size = 0x8, scoped, tag = 'scoped memory for tpu_custom_call.1']
    %10 = vsyncpa [#allocation4], 0
    %s11 = scalar_lea.sflag [#allocation4], 1
    %12 = vsyncpa %s11, 0
    loop: start=0, step=1, limit=4
    $region2: #{tpu_custom_call.1} parent=1 // loop_pre_header
      _
    $region3: #{tpu_custom_call.1} parent=1 // loop_header
      %s14 = sphi 0, %s18
      %p15 = scmp.ge.s32.totalorder %s14, 4
      %s21 = sphi 0, %s33
      %s22 = sphi 0, %s29
      %s23 = sphi 0, %s21
      %s24 = sphi 0, %s22
      %s25 = sphi 0, %s23
      %s26 = sphi 0, %s24
      %s36 = sphi 0, %s38
      %s39 = sphi 0, %s36
      %s40 = sphi 0, %s39
      %s56 = sphi 0, %s40
      %s62 = sphi 0, %s64
      %s65 = sphi 0, %s62
      %s66 = sphi 0, %s65
      %s82 = sphi 0, %s66
      %s88 = sphi 0, %s90
      %s91 = sphi 0, %s88
      %s92 = sphi 0, %s91
      %s108 = sphi 0, %s92
      %s114 = sphi 0, %s116
      %s117 = sphi 0, %s114
      %s118 = sphi 0, %s117
      %s134 = sphi 0, %s118
      %s138 = sphi 0, %s138
      %s140 = sphi 0, %s138
      %s141 = sphi 0, %s140
      %s155 = sphi 0, %s141
      %s161 = sphi 0, %s163
      %s164 = sphi 0, %s161
      %s165 = sphi 0, %s164
      %s181 = sphi 0, %s165
    $region4: #{tpu_custom_call.1} parent=1 // loop_header_branch
      %17 = sbr.rel (%p15) target = $region8
    $region5: #{tpu_custom_call.1} parent=1 // loop_body
      %s19 = ssub.s32 %s14, 1
      %s20 = ssub.s32 %s14, 2
      %s27 = sadd.s32 1, %s22
      %p28 = scmp.ge.s32.totalorder %s27, 1
      %s29 = scalar_select %p28, 0, %s27
      %s30 = sadd.s32 1, %s21
      %s31 = scalar_select %p28, %s30, %s21
      %p32 = scmp.ge.s32.totalorder %s31, 2
      %s33 = scalar_select %p32, 0, %s31
      %s34 = ssub.s32 %s21, %s33
      %p35 = scmp.eq.s32.totalorder %s34, 0
      %s37 = sadd.s32 %s36, 1
      %s38 = scalar_select %p35, %s36, %s37
      %p41 = pneg %p35
      %p42 = scmp.eq.s32.totalorder %s14, 1
      %p43 = por %p41, %p42
      %p44 = scmp.ne.s32.totalorder %s36, %s39
      %p45 = scmp.eq.s32.totalorder %s14, 0
      %p46 = por %p44, %p45
      %p47 = scmp.ne.s32.totalorder %s36, %s39
      %p48 = scmp.eq.s32.totalorder %s19, 1
      %p49 = por %p47, %p48
      %p50 = scmp.ne.s32.totalorder %s39, %s40
      %p51 = scmp.eq.s32.totalorder %s19, 0
      %p52 = por %p50, %p51
      %p53 = scmp.ne.s32.totalorder %s39, %s40
      %p54 = scmp.eq.s32.totalorder %s20, 1
      %p55 = por %p53, %p54
      %p57 = scmp.ne.s32.totalorder %s40, %s56
      %p58 = scmp.eq.s32.totalorder %s20, 0
      %p59 = por %p57, %p58
      %s60 = ssub.s32 %s22, %s29
      %p61 = scmp.eq.s32.totalorder %s60, 0
      %s63 = sadd.s32 %s62, 1
      %s64 = scalar_select %p61, %s62, %s63
      %p67 = pneg %p61
      %p68 = scmp.eq.s32.totalorder %s14, 1
      %p69 = por %p67, %p68
      %p70 = scmp.ne.s32.totalorder %s62, %s65
      %p71 = scmp.eq.s32.totalorder %s14, 0
      %p72 = por %p70, %p71
      %p73 = scmp.ne.s32.totalorder %s62, %s65
      %p74 = scmp.eq.s32.totalorder %s19, 1
      %p75 = por %p73, %p74
      %p76 = scmp.ne.s32.totalorder %s65, %s66
      %p77 = scmp.eq.s32.totalorder %s19, 0
      %p78 = por %p76, %p77
      %p79 = scmp.ne.s32.totalorder %s65, %s66
      %p80 = scmp.eq.s32.totalorder %s20, 1
      %p81 = por %p79, %p80
      %p83 = scmp.ne.s32.totalorder %s66, %s82
      %p84 = scmp.eq.s32.totalorder %s20, 0
      %p85 = por %p83, %p84
      %s86 = ssub.s32 %s22, %s29
      %p87 = scmp.eq.s32.totalorder %s86, 0
      %s89 = sadd.s32 %s88, 1
      %s90 = scalar_select %p87, %s88, %s89
      %p93 = pneg %p87
      %p94 = scmp.eq.s32.totalorder %s14, 1
      %p95 = por %p93, %p94
      %p96 = scmp.ne.s32.totalorder %s88, %s91
      %p97 = scmp.eq.s32.totalorder %s14, 0
      %p98 = por %p96, %p97
      %p99 = scmp.ne.s32.totalorder %s88, %s91
      %p100 = scmp.eq.s32.totalorder %s19, 1
      %p101 = por %p99, %p100
      %p102 = scmp.ne.s32.totalorder %s91, %s92
      %p103 = scmp.eq.s32.totalorder %s19, 0
      %p104 = por %p102, %p103
      %p105 = scmp.ne.s32.totalorder %s91, %s92
      %p106 = scmp.eq.s32.totalorder %s20, 1
      %p107 = por %p105, %p106
      %p109 = scmp.ne.s32.totalorder %s92, %s108
      %p110 = scmp.eq.s32.totalorder %s20, 0
      %p111 = por %p109, %p110
      %s112 = ssub.s32 %s22, %s29
      %p113 = scmp.eq.s32.totalorder %s112, 0
      %s115 = sadd.s32 %s114, 1
      %s116 = scalar_select %p113, %s114, %s115
      %p119 = pneg %p113
      %p120 = scmp.eq.s32.totalorder %s14, 1
      %p121 = por %p119, %p120
      %p122 = scmp.ne.s32.totalorder %s114, %s117
      %p123 = scmp.eq.s32.totalorder %s14, 0
      %p124 = por %p122, %p123
      %p125 = scmp.ne.s32.totalorder %s114, %s117
      %p126 = scmp.eq.s32.totalorder %s19, 1
      %p127 = por %p125, %p126
      %p128 = scmp.ne.s32.totalorder %s117, %s118
      %p129 = scmp.eq.s32.totalorder %s19, 0
      %p130 = por %p128, %p129
      %p131 = scmp.ne.s32.totalorder %s117, %s118
      %p132 = scmp.eq.s32.totalorder %s20, 1
      %p133 = por %p131, %p132
      %p135 = scmp.ne.s32.totalorder %s118, %s134
      %p136 = scmp.eq.s32.totalorder %s20, 0
      %p137 = por %p135, %p136
      %s139 = sadd.s32 %s138, 1
      %p142 = scmp.eq.s32.totalorder %s14, 1
      %p143 = scmp.ne.s32.totalorder %s138, %s140
      %p144 = scmp.eq.s32.totalorder %s14, 0
      %p145 = por %p143, %p144
      %p146 = scmp.ne.s32.totalorder %s138, %s140
      %p147 = scmp.eq.s32.totalorder %s19, 1
      %p148 = por %p146, %p147
      %p149 = scmp.ne.s32.totalorder %s140, %s141
      %p150 = scmp.eq.s32.totalorder %s19, 0
      %p151 = por %p149, %p150
      %p152 = scmp.ne.s32.totalorder %s140, %s141
      %p153 = scmp.eq.s32.totalorder %s20, 1
      %p154 = por %p152, %p153
      %p156 = scmp.ne.s32.totalorder %s141, %s155
      %p157 = scmp.eq.s32.totalorder %s20, 0
      %p158 = por %p156, %p157
      %s159 = ssub.s32 %s21, %s33
      %p160 = scmp.eq.s32.totalorder %s159, 0
      %s162 = sadd.s32 %s161, 1
      %s163 = scalar_select %p160, %s161, %s162
      %p166 = pneg %p160
      %p167 = scmp.eq.s32.totalorder %s14, 1
      %p168 = por %p166, %p167
      %p169 = scmp.ne.s32.totalorder %s161, %s164
      %p170 = scmp.eq.s32.totalorder %s14, 0
      %p171 = por %p169, %p170
      %p172 = scmp.ne.s32.totalorder %s161, %s164
      %p173 = scmp.eq.s32.totalorder %s19, 1
      %p174 = por %p172, %p173
      %p175 = scmp.ne.s32.totalorder %s164, %s165
      %p176 = scmp.eq.s32.totalorder %s19, 0
      %p177 = por %p175, %p176
      %p178 = scmp.ne.s32.totalorder %s164, %s165
      %p179 = scmp.eq.s32.totalorder %s20, 1
      %p180 = por %p178, %p179
      %p182 = scmp.ne.s32.totalorder %s165, %s181
      %p183 = scmp.eq.s32.totalorder %s20, 0
      %p184 = por %p182, %p183
      %p185 = scmp.le.s32.totalorder 1, %s14
      %p186 = scmp.lt.s32.totalorder %s14, 3
      %p187 = pnand %p185, %p186
      %p188 = pneg %p187
      // Predicated region
      $region9: #{tpu_custom_call.1} parent=5 // pred_check
        _
      $region10: #{tpu_custom_call.1} parent=5 // pred_check_branch
        %190 = sbr.rel (%p187) target = $region12
      $region11: #{tpu_custom_call.1} parent=5 // pred_region
        %s191 = ssub.s32 %s14, 1
        // Predicated region
        $region13: #{tpu_custom_call.1} parent=11 // pred_check
          %p192 = pneg %p78
        $region14: #{tpu_custom_call.1} parent=11 // pred_check_branch
          %194 = sbr.rel (%p192) target = $region16
        $region15: #{tpu_custom_call.1} parent=11 // pred_region
          %p195 = scmp.lt.s32.totalorder %s24, 0
          %s196 = scalar_select %p195, %s24, 0
          %s197 = smul.addr %s196, 4
          %s198 = scalar_lea.vmem %s1, %s197
        $region16: #{tpu_custom_call.1} parent=11 // pred_fallthru
          _
        // Predicated region
        $region17: #{tpu_custom_call.1} parent=11 // pred_check
          %p199 = pneg %p104
        $region18: #{tpu_custom_call.1} parent=11 // pred_check_branch
          %201 = sbr.rel (%p199) target = $region20
        $region19: #{tpu_custom_call.1} parent=11 // pred_region
          %p202 = scmp.lt.s32.totalorder %s24, 0
          %s203 = scalar_select %p202, %s24, 0
          %s204 = scalar_lea.vmem %s2, %s203
        $region20: #{tpu_custom_call.1} parent=11 // pred_fallthru
          _
        // Predicated region
        $region21: #{tpu_custom_call.1} parent=11 // pred_check
          %p205 = pneg %p130
        $region22: #{tpu_custom_call.1} parent=11 // pred_check_branch
          %207 = sbr.rel (%p205) target = $region24
        $region23: #{tpu_custom_call.1} parent=11 // pred_region
          %s208 = smul.u32 16, %s24
          %p209 = scmp.lt.s32.totalorder %s208, 15
          %s210 = scalar_select %p209, %s208, 15
          %s211 = smul.addr %s210, 4
          %s212 = scalar_lea.vmem %s3, %s211
          %s213 = smul.u32 16, %s24
        $region24: #{tpu_custom_call.1} parent=11 // pred_fallthru
          _
        // Predicated region
        $region25: #{tpu_custom_call.1} parent=11 // pred_check
          %p214 = pneg %p151
        $region26: #{tpu_custom_call.1} parent=11 // pred_check_branch
          %216 = sbr.rel (%p214) target = $region28
        $region27: #{tpu_custom_call.1} parent=11 // pred_region
          _
        $region28: #{tpu_custom_call.1} parent=11 // pred_fallthru
          _
      $region12: #{tpu_custom_call.1} parent=5 // pred_fallthru
        _
      %p217 = scmp.lt.s32.totalorder %s14, 2
      // Predicated region
      $region29: #{tpu_custom_call.1} parent=5 // pred_check
        %p218 = pneg %p217
      $region30: #{tpu_custom_call.1} parent=5 // pred_check_branch
        %220 = sbr.rel (%p218) target = $region32
      $region31: #{tpu_custom_call.1} parent=5 // pred_region
        // Predicated region
        $region33: #{tpu_custom_call.1} parent=31 // pred_check
          %p221 = pneg %p46
        $region34: #{tpu_custom_call.1} parent=31 // pred_check_branch
          %223 = sbr.rel (%p221) target = $region36
        $region35: #{tpu_custom_call.1} parent=31 // pred_region
          %s224 = smul.u32 16, %s21
          %p225 = scmp.lt.s32.totalorder %s224, 31
          %s226 = scalar_select %p225, %s224, 31
          %s227 = smul.addr %s226, 8
          %s228 = scalar_lea.vmem %s0, %s227
          %s229 = smul.u32 16, %s21
        $region36: #{tpu_custom_call.1} parent=31 // pred_fallthru
          _
      $region32: #{tpu_custom_call.1} parent=5 // pred_fallthru
        _
      %p230 = scmp.le.s32.totalorder 1, %s14
      %p231 = scmp.lt.s32.totalorder %s14, 3
      %p232 = pnand %p230, %p231
      %p233 = pneg %p232
      // Predicated region
      $region37: #{tpu_custom_call.1} parent=5 // pred_check
        _
      $region38: #{tpu_custom_call.1} parent=5 // pred_check_branch
        %235 = sbr.rel (%p232) target = $region40
      $region39: #{tpu_custom_call.1} parent=5 // pred_region
        %s236 = ssub.s32 %s14, 1
        %s237 = smul.u32 16, %s23
        %p238 = scmp.lt.s32.totalorder %s237, 31
        %s239 = scalar_select %p238, %s237, 31
        %s240 = smul.addr %s239, 8
        %s241 = scalar_lea.vmem %s0, %s240
        %p242 = pneg %p52
        %p243 = pneg %p49
        %p244 = scmp.lt.s32.totalorder %s24, 0
        %s245 = scalar_select %p244, %s24, 0
        %s246 = smul.addr %s245, 4
        %s247 = scalar_lea.vmem %s1, %s246
        %p248 = pneg %p78
        %p249 = pneg %p75
        %p250 = scmp.lt.s32.totalorder %s24, 0
        %s251 = scalar_select %p250, %s24, 0
        %s252 = scalar_lea.vmem %s2, %s251
        %p253 = pneg %p104
        %p254 = pneg %p101
        %s255 = smul.u32 16, %s24
        %p256 = scmp.lt.s32.totalorder %s255, 15
        %s257 = scalar_select %p256, %s255, 15
        %s258 = smul.addr %s257, 4
        %s259 = scalar_lea.vmem %s3, %s258
        %p260 = pneg %p130
        %p261 = pneg %p127
        %p262 = pneg %p151
        %p263 = pneg %p148
        %p264 = pneg %p177
        %p265 = pneg %p174
        %s266 = sand.u32 %s164, 1
        %s267 = scalar_lea.sflag [#allocation4], %s266
        %s268 = sand.u32 %s164, 1
        %s269 = smul.addr %s268, 128
        %s270 = scalar_lea.vmem [#allocation3], %s269
        %s271 = smul.u32 16, %s23
        %p272 = scmp.lt.s32.totalorder %s271, 31
        %s273 = scalar_select %p272, %s271, 31
        %s274 = smul.addr %s273, 8
        %s275 = scalar_lea.vmem %s0, %s274
        %s276 = smul.u32 16, %s23
        %p277 = scmp.lt.s32.totalorder %s24, 0
        %s278 = scalar_select %p277, %s24, 0
        %s279 = smul.addr %s278, 4
        %s280 = scalar_lea.vmem %s1, %s279
        %p281 = scmp.lt.s32.totalorder %s24, 0
        %s282 = scalar_select %p281, %s24, 0
        %s283 = scalar_lea.vmem %s2, %s282
        %s284 = smul.u32 16, %s24
        %p285 = scmp.lt.s32.totalorder %s284, 15
        %s286 = scalar_select %p285, %s284, 15
        %s287 = smul.addr %s286, 4
        %s288 = scalar_lea.vmem %s3, %s287
        %s289 = smul.u32 16, %s24
        %s290 = smul.u32 16, %s23
        %p292 = scmp.eq.s32.totalorder %s24, 0
        // Predicated region
        $region41: #{tpu_custom_call.1} parent=39 // pred_check
          %p293 = pneg %p292
        $region42: #{tpu_custom_call.1} parent=39 // pred_check_branch
          %295 = sbr.rel (%p293) target = $region44
        $region43: #{tpu_custom_call.1} parent=39 // pred_region
          %296 = vst [vmem:[#allocation2] sm:$0xff] 0.0
          %297 = vst [vmem:[#allocation2 + $0x8] sm:$0xff] 0.0
          %298 = vst [vmem:[#allocation2 + $0x10] sm:$0xff] 0.0
          %299 = vst [vmem:[#allocation2 + $0x18] sm:$0xff] 0.0
          %300 = vst [vmem:[#allocation2 + $0x20] sm:$0xff] 0.0
          %301 = vst [vmem:[#allocation2 + $0x28] sm:$0xff] 0.0
          %302 = vst [vmem:[#allocation2 + $0x30] sm:$0xff] 0.0
          %303 = vst [vmem:[#allocation2 + $0x38] sm:$0xff] 0.0
          %304 = vst [vmem:[#allocation2 + $0x40] sm:$0xff] 0.0
          %305 = vst [vmem:[#allocation2 + $0x48] sm:$0xff] 0.0
          %306 = vst [vmem:[#allocation2 + $0x50] sm:$0xff] 0.0
          %307 = vst [vmem:[#allocation2 + $0x58] sm:$0xff] 0.0
          %308 = vst [vmem:[#allocation2 + $0x60] sm:$0xff] 0.0
          %309 = vst [vmem:[#allocation2 + $0x68] sm:$0xff] 0.0
          %310 = vst [vmem:[#allocation2 + $0x70] sm:$0xff] 0.0
          %311 = vst [vmem:[#allocation2 + $0x78] sm:$0xff] 0.0
        $region44: #{tpu_custom_call.1} parent=39 // pred_fallthru
          _
        %v312 = vld [vmem:[%s275] sm:$0xff]
        %v313 = vld [vmem:[%s275 + $0x8] sm:$0xff]
        %v314 = vld [vmem:[%s275 + $0x10] sm:$0xff]
        %v315 = vld [vmem:[%s275 + $0x18] sm:$0xff]
        %v316 = vld [vmem:[%s275 + $0x20] sm:$0xff]
        %v317 = vld [vmem:[%s275 + $0x28] sm:$0xff]
        %v318 = vld [vmem:[%s275 + $0x30] sm:$0xff]
        %v319 = vld [vmem:[%s275 + $0x38] sm:$0xff]
        %v320 = vld [vmem:[%s275 + $0x40] sm:$0xff]
        %v321 = vld [vmem:[%s275 + $0x48] sm:$0xff]
        %v322 = vld [vmem:[%s275 + $0x50] sm:$0xff]
        %v323 = vld [vmem:[%s275 + $0x58] sm:$0xff]
        %v324 = vld [vmem:[%s275 + $0x60] sm:$0xff]
        %v325 = vld [vmem:[%s275 + $0x68] sm:$0xff]
        %v326 = vld [vmem:[%s275 + $0x70] sm:$0xff]
        %v327 = vld [vmem:[%s275 + $0x78] sm:$0xff]
        %v328 = vpack.c.bf16 %v313, %v312
        %v329 = vpack.c.bf16 %v315, %v314
        %v330 = vpack.c.bf16 %v317, %v316
        %v331 = vpack.c.bf16 %v319, %v318
        %v332 = vpack.c.bf16 %v321, %v320
        %v333 = vpack.c.bf16 %v323, %v322
        %v334 = vpack.c.bf16 %v325, %v324
        %v335 = vpack.c.bf16 %v327, %v326
        %v336 = vld [vmem:[%s280] sm:$0xf]
        %v337 = vld [vmem:[%s280 + $0x4] sm:$0xf]
        %v338 = vld [vmem:[%s280 + $0x8] sm:$0xf]
        %v339 = vld [vmem:[%s280 + $0xc] sm:$0xf]
        %v340 = vld [vmem:[%s280 + $0x10] sm:$0xf]
        %v341 = vld [vmem:[%s280 + $0x14] sm:$0xf]
        %v342 = vld [vmem:[%s280 + $0x18] sm:$0xf]
        %v343 = vld [vmem:[%s280 + $0x1c] sm:$0xf]
        %v344 = vld [vmem:[%s283] sm:$0x1]
        %v346 = vperm.slane %v344, 0
        %v356 = vunpack.c.l.b16 %v336
        %v357 = vunpack.c.l.b16 %v337
        %v358 = vunpack.c.l.b16 %v338
        %v359 = vunpack.c.l.b16 %v339
        %v360 = vunpack.c.l.b16 %v340
        %v361 = vunpack.c.l.b16 %v341
        %v362 = vunpack.c.l.b16 %v342
        %v363 = vunpack.c.l.b16 %v343
        %v364 = vpack.c.b16 %v357, %v356
        %v365 = vpack.c.b16 %v359, %v358
        %v366 = vpack.c.b16 %v361, %v360
        %v367 = vpack.c.b16 %v363, %v362
        %vm372 = vcmask 523264
        %v374 = vsel %vm372, %v328, 0
        %v377 = vsel %vm372, %v329, 0
        %v380 = vsel %vm372, %v330, 0
        %v383 = vsel %vm372, %v331, 0
        %v386 = vsel %vm372, %v332, 0
        %v389 = vsel %vm372, %v333, 0
        %v392 = vsel %vm372, %v334, 0
        %v395 = vsel %vm372, %v335, 0
        %397 = vmatpush.bf16.msra.mxu0 0
        %398 = vmatpush.bf16.msra.mxu0 0
        %399 = vmatpush.bf16.msra.mxu0 0
        %400 = vmatpush.bf16.msra.mxu0 0
        %401 = vmatpush.bf16.msra.mxu0 %v367
        %402 = vmatpush.bf16.msra.mxu0 %v366
        %403 = vmatpush.bf16.msra.mxu0 %v365
        %404 = vmatpush.bf16.msra.mxu0 %v364
        %405 = vmatmul.bf16.gmra.mxu0 %v374
        %v406 = vpop.f32.mrf.mxu0
        %v407 = vadd.f32 %v346, %v406
        %v408 = vpop.f32.mrf.mxu0
        %v409 = vadd.f32 %v346, %v408
        %410 = vmatmul.bf16.gmra.mxu0 %v377
        %v411 = vpop.f32.mrf.mxu0
        %v412 = vadd.f32 %v346, %v411
        %v413 = vpop.f32.mrf.mxu0
        %v414 = vadd.f32 %v346, %v413
        %415 = vmatmul.bf16.gmra.mxu0 %v380
        %v416 = vpop.f32.mrf.mxu0
        %v417 = vadd.f32 %v346, %v416
        %v418 = vpop.f32.mrf.mxu0
        %v419 = vadd.f32 %v346, %v418
        %420 = vmatmul.bf16.gmra.mxu0 %v383
        %v421 = vpop.f32.mrf.mxu0
        %v422 = vadd.f32 %v346, %v421
        %v423 = vpop.f32.mrf.mxu0
        %v424 = vadd.f32 %v346, %v423
        %425 = vmatmul.bf16.gmra.mxu0 %v386
        %v426 = vpop.f32.mrf.mxu0
        %v427 = vadd.f32 %v346, %v426
        %v428 = vpop.f32.mrf.mxu0
        %v429 = vadd.f32 %v346, %v428
        %430 = vmatmul.bf16.gmra.mxu0 %v389
        %v431 = vpop.f32.mrf.mxu0
        %v432 = vadd.f32 %v346, %v431
        %v433 = vpop.f32.mrf.mxu0
        %v434 = vadd.f32 %v346, %v433
        %435 = vmatmul.bf16.gmra.mxu0 %v392
        %v436 = vpop.f32.mrf.mxu0
        %v437 = vadd.f32 %v346, %v436
        %v438 = vpop.f32.mrf.mxu0
        %v439 = vadd.f32 %v346, %v438
        %440 = vmatmul.bf16.gmra.mxu0 %v395
        %v441 = vpop.f32.mrf.mxu0
        %v442 = vadd.f32 %v346, %v441
        %v443 = vpop.f32.mrf.mxu0
        %v444 = vadd.f32 %v346, %v443
        %445 = vdwg.mxu0
        %v446 = vmul.f32 %v407, 0.2
        %v447 = vmul.f32 %v409, 0.2
        %v448 = vmul.f32 %v412, 0.2
        %v449 = vmul.f32 %v414, 0.2
        %v450 = vmul.f32 %v417, 0.2
        %v451 = vmul.f32 %v419, 0.2
        %v452 = vmul.f32 %v422, 0.2
        %v453 = vmul.f32 %v424, 0.2
        %v454 = vmul.f32 %v427, 0.2
        %v455 = vmul.f32 %v429, 0.2
        %v456 = vmul.f32 %v432, 0.2
        %v457 = vmul.f32 %v434, 0.2
        %v458 = vmul.f32 %v437, 0.2
        %v459 = vmul.f32 %v439, 0.2
        %v460 = vmul.f32 %v442, 0.2
        %v461 = vmul.f32 %v444, 0.2
        %v462 = vmax.f32 %v407, %v446
        %v463 = vmax.f32 %v409, %v447
        %v464 = vmax.f32 %v412, %v448
        %v465 = vmax.f32 %v414, %v449
        %v466 = vmax.f32 %v417, %v450
        %v467 = vmax.f32 %v419, %v451
        %v468 = vmax.f32 %v422, %v452
        %v469 = vmax.f32 %v424, %v453
        %v470 = vmax.f32 %v427, %v454
        %v471 = vmax.f32 %v429, %v455
        %v472 = vmax.f32 %v432, %v456
        %v473 = vmax.f32 %v434, %v457
        %v474 = vmax.f32 %v437, %v458
        %v475 = vmax.f32 %v439, %v459
        %v476 = vmax.f32 %v442, %v460
        %v477 = vmax.f32 %v444, %v461
        %v478 = vld [vmem:[#allocation2] sm:$0xff]
        %v479 = vld [vmem:[#allocation2 + $0x8] sm:$0xff]
        %v480 = vld [vmem:[#allocation2 + $0x10] sm:$0xff]
        %v481 = vld [vmem:[#allocation2 + $0x18] sm:$0xff]
        %v482 = vld [vmem:[#allocation2 + $0x20] sm:$0xff]
        %v483 = vld [vmem:[#allocation2 + $0x28] sm:$0xff]
        %v484 = vld [vmem:[#allocation2 + $0x30] sm:$0xff]
        %v485 = vld [vmem:[#allocation2 + $0x38] sm:$0xff]
        %v486 = vld [vmem:[#allocation2 + $0x40] sm:$0xff]
        %v487 = vld [vmem:[#allocation2 + $0x48] sm:$0xff]
        %v488 = vld [vmem:[#allocation2 + $0x50] sm:$0xff]
        %v489 = vld [vmem:[#allocation2 + $0x58] sm:$0xff]
        %v490 = vld [vmem:[#allocation2 + $0x60] sm:$0xff]
        %v491 = vld [vmem:[#allocation2 + $0x68] sm:$0xff]
        %v492 = vld [vmem:[#allocation2 + $0x70] sm:$0xff]
        %v493 = vld [vmem:[#allocation2 + $0x78] sm:$0xff]
        %v494 = vpack.c.bf16 %v463, %v462
        %v495 = vpack.c.bf16 %v465, %v464
        %v496 = vpack.c.bf16 %v467, %v466
        %v497 = vpack.c.bf16 %v469, %v468
        %v498 = vpack.c.bf16 %v471, %v470
        %v499 = vpack.c.bf16 %v473, %v472
        %v500 = vpack.c.bf16 %v475, %v474
        %v501 = vpack.c.bf16 %v477, %v476
        %v502 = vld [vmem:[%s288] sm:$0xf]
        %v503 = vld [vmem:[%s288 + $0x4] sm:$0xf]
        %v504 = vld [vmem:[%s288 + $0x8] sm:$0xf]
        %v505 = vld [vmem:[%s288 + $0xc] sm:$0xf]
        %v506 = vld [vmem:[%s288 + $0x10] sm:$0xf]
        %v507 = vld [vmem:[%s288 + $0x14] sm:$0xf]
        %v508 = vld [vmem:[%s288 + $0x18] sm:$0xf]
        %v509 = vld [vmem:[%s288 + $0x1c] sm:$0xf]
        %v510 = vld [vmem:[%s288 + $0x20] sm:$0xf]
        %v511 = vld [vmem:[%s288 + $0x24] sm:$0xf]
        %v512 = vld [vmem:[%s288 + $0x28] sm:$0xf]
        %v513 = vld [vmem:[%s288 + $0x2c] sm:$0xf]
        %v514 = vld [vmem:[%s288 + $0x30] sm:$0xf]
        %v515 = vld [vmem:[%s288 + $0x34] sm:$0xf]
        %v516 = vld [vmem:[%s288 + $0x38] sm:$0xf]
        %v517 = vld [vmem:[%s288 + $0x3c] sm:$0xf]
        %v534 = vunpack.c.l.b16 %v502
        %v535 = vunpack.c.l.b16 %v503
        %v536 = vunpack.c.l.b16 %v504
        %v537 = vunpack.c.l.b16 %v505
        %v538 = vunpack.c.l.b16 %v506
        %v539 = vunpack.c.l.b16 %v507
        %v540 = vunpack.c.l.b16 %v508
        %v541 = vunpack.c.l.b16 %v509
        %v542 = vunpack.c.l.b16 %v510
        %v543 = vunpack.c.l.b16 %v511
        %v544 = vunpack.c.l.b16 %v512
        %v545 = vunpack.c.l.b16 %v513
        %v546 = vunpack.c.l.b16 %v514
        %v547 = vunpack.c.l.b16 %v515
        %v548 = vunpack.c.l.b16 %v516
        %v549 = vunpack.c.l.b16 %v517
        %v550 = vpack.c.b16 %v535, %v534
        %v551 = vpack.c.b16 %v537, %v536
        %v552 = vpack.c.b16 %v539, %v538
        %v553 = vpack.c.b16 %v541, %v540
        %v554 = vpack.c.b16 %v543, %v542
        %v555 = vpack.c.b16 %v545, %v544
        %v556 = vpack.c.b16 %v547, %v546
        %v557 = vpack.c.b16 %v549, %v548
        %566 = vmatpush.bf16.msra.mxu0 %v557
        %567 = vmatpush.bf16.msra.mxu0 %v556
        %568 = vmatpush.bf16.msra.mxu0 %v555
        %569 = vmatpush.bf16.msra.mxu0 %v554
        %570 = vmatpush.bf16.msra.mxu0 %v553
        %571 = vmatpush.bf16.msra.mxu0 %v552
        %572 = vmatpush.bf16.msra.mxu0 %v551
        %573 = vmatpush.bf16.msra.mxu0 %v550
        %574 = vmatmul.bf16.gmra.mxu0 %v494
        %v575 = vpop.f32.mrf.mxu0
        %v576 = vadd.f32 0.0, %v575
        %v577 = vpop.f32.mrf.mxu0
        %v578 = vadd.f32 0.0, %v577
        %579 = vmatmul.bf16.gmra.mxu0 %v495
        %v580 = vpop.f32.mrf.mxu0
        %v581 = vadd.f32 0.0, %v580
        %v582 = vpop.f32.mrf.mxu0
        %v583 = vadd.f32 0.0, %v582
        %584 = vmatmul.bf16.gmra.mxu0 %v496
        %v585 = vpop.f32.mrf.mxu0
        %v586 = vadd.f32 0.0, %v585
        %v587 = vpop.f32.mrf.mxu0
        %v588 = vadd.f32 0.0, %v587
        %589 = vmatmul.bf16.gmra.mxu0 %v497
        %v590 = vpop.f32.mrf.mxu0
        %v591 = vadd.f32 0.0, %v590
        %v592 = vpop.f32.mrf.mxu0
        %v593 = vadd.f32 0.0, %v592
        %594 = vmatmul.bf16.gmra.mxu0 %v498
        %v595 = vpop.f32.mrf.mxu0
        %v596 = vadd.f32 0.0, %v595
        %v597 = vpop.f32.mrf.mxu0
        %v598 = vadd.f32 0.0, %v597
        %599 = vmatmul.bf16.gmra.mxu0 %v499
        %v600 = vpop.f32.mrf.mxu0
        %v601 = vadd.f32 0.0, %v600
        %v602 = vpop.f32.mrf.mxu0
        %v603 = vadd.f32 0.0, %v602
        %604 = vmatmul.bf16.gmra.mxu0 %v500
        %v605 = vpop.f32.mrf.mxu0
        %v606 = vadd.f32 0.0, %v605
        %v607 = vpop.f32.mrf.mxu0
        %v608 = vadd.f32 0.0, %v607
        %609 = vmatmul.bf16.gmra.mxu0 %v501
        %v610 = vpop.f32.mrf.mxu0
        %v611 = vadd.f32 0.0, %v610
        %v612 = vpop.f32.mrf.mxu0
        %v613 = vadd.f32 0.0, %v612
        %614 = vdwg.mxu0
        %v615 = vadd.f32 %v478, %v576
        %v616 = vadd.f32 %v479, %v578
        %v617 = vadd.f32 %v480, %v581
        %v618 = vadd.f32 %v481, %v583
        %v619 = vadd.f32 %v482, %v586
        %v620 = vadd.f32 %v483, %v588
        %v621 = vadd.f32 %v484, %v591
        %v622 = vadd.f32 %v485, %v593
        %v623 = vadd.f32 %v486, %v596
        %v624 = vadd.f32 %v487, %v598
        %v625 = vadd.f32 %v488, %v601
        %v626 = vadd.f32 %v489, %v603
        %v627 = vadd.f32 %v490, %v606
        %v628 = vadd.f32 %v491, %v608
        %v629 = vadd.f32 %v492, %v611
        %v630 = vadd.f32 %v493, %v613
        %631 = vst [vmem:[#allocation2] sm:$0xff] %v615
        %632 = vst [vmem:[#allocation2 + $0x8] sm:$0xff] %v616
        %633 = vst [vmem:[#allocation2 + $0x10] sm:$0xff] %v617
        %634 = vst [vmem:[#allocation2 + $0x18] sm:$0xff] %v618
        %635 = vst [vmem:[#allocation2 + $0x20] sm:$0xff] %v619
        %636 = vst [vmem:[#allocation2 + $0x28] sm:$0xff] %v620
        %637 = vst [vmem:[#allocation2 + $0x30] sm:$0xff] %v621
        %638 = vst [vmem:[#allocation2 + $0x38] sm:$0xff] %v622
        %639 = vst [vmem:[#allocation2 + $0x40] sm:$0xff] %v623
        %640 = vst [vmem:[#allocation2 + $0x48] sm:$0xff] %v624
        %641 = vst [vmem:[#allocation2 + $0x50] sm:$0xff] %v625
        %642 = vst [vmem:[#allocation2 + $0x58] sm:$0xff] %v626
        %643 = vst [vmem:[#allocation2 + $0x60] sm:$0xff] %v627
        %644 = vst [vmem:[#allocation2 + $0x68] sm:$0xff] %v628
        %645 = vst [vmem:[#allocation2 + $0x70] sm:$0xff] %v629
        %646 = vst [vmem:[#allocation2 + $0x78] sm:$0xff] %v630
        // Predicated region
        $region45: #{tpu_custom_call.1} parent=39 // pred_check
          %p647 = pneg %p292
        $region46: #{tpu_custom_call.1} parent=39 // pred_check_branch
          %649 = sbr.rel (%p647) target = $region48
        $region47: #{tpu_custom_call.1} parent=39 // pred_region
          %v650 = vld [vmem:[#allocation2] sm:$0xff]
          %v651 = vld [vmem:[#allocation2 + $0x8] sm:$0xff]
          %v652 = vld [vmem:[#allocation2 + $0x10] sm:$0xff]
          %v653 = vld [vmem:[#allocation2 + $0x18] sm:$0xff]
          %v654 = vld [vmem:[#allocation2 + $0x20] sm:$0xff]
          %v655 = vld [vmem:[#allocation2 + $0x28] sm:$0xff]
          %v656 = vld [vmem:[#allocation2 + $0x30] sm:$0xff]
          %v657 = vld [vmem:[#allocation2 + $0x38] sm:$0xff]
          %v658 = vld [vmem:[#allocation2 + $0x40] sm:$0xff]
          %v659 = vld [vmem:[#allocation2 + $0x48] sm:$0xff]
          %v660 = vld [vmem:[#allocation2 + $0x50] sm:$0xff]
          %v661 = vld [vmem:[#allocation2 + $0x58] sm:$0xff]
          %v662 = vld [vmem:[#allocation2 + $0x60] sm:$0xff]
          %v663 = vld [vmem:[#allocation2 + $0x68] sm:$0xff]
          %v664 = vld [vmem:[#allocation2 + $0x70] sm:$0xff]
          %v665 = vld [vmem:[#allocation2 + $0x78] sm:$0xff]
          %v666 = vld [vmem:[%s4] sm:$0x1]
          %v668 = vperm.slane %v666, 0
          %v670 = vadd.f32 %v650, %v668
          %v671 = vadd.f32 %v651, %v668
          %v672 = vadd.f32 %v652, %v668
          %v673 = vadd.f32 %v653, %v668
          %v674 = vadd.f32 %v654, %v668
          %v675 = vadd.f32 %v655, %v668
          %v676 = vadd.f32 %v656, %v668
          %v677 = vadd.f32 %v657, %v668
          %v678 = vadd.f32 %v658, %v668
          %v679 = vadd.f32 %v659, %v668
          %v680 = vadd.f32 %v660, %v668
          %v681 = vadd.f32 %v661, %v668
          %v682 = vadd.f32 %v662, %v668
          %v683 = vadd.f32 %v663, %v668
          %v684 = vadd.f32 %v664, %v668
          %v685 = vadd.f32 %v665, %v668
          %686 = vst [vmem:[%s270] sm:$0xff] %v670
          %687 = vst [vmem:[%s270 + $0x8] sm:$0xff] %v671
          %688 = vst [vmem:[%s270 + $0x10] sm:$0xff] %v672
          %689 = vst [vmem:[%s270 + $0x18] sm:$0xff] %v673
          %690 = vst [vmem:[%s270 + $0x20] sm:$0xff] %v674
          %691 = vst [vmem:[%s270 + $0x28] sm:$0xff] %v675
          %692 = vst [vmem:[%s270 + $0x30] sm:$0xff] %v676
          %693 = vst [vmem:[%s270 + $0x38] sm:$0xff] %v677
          %694 = vst [vmem:[%s270 + $0x40] sm:$0xff] %v678
          %695 = vst [vmem:[%s270 + $0x48] sm:$0xff] %v679
          %696 = vst [vmem:[%s270 + $0x50] sm:$0xff] %v680
          %697 = vst [vmem:[%s270 + $0x58] sm:$0xff] %v681
          %698 = vst [vmem:[%s270 + $0x60] sm:$0xff] %v682
          %699 = vst [vmem:[%s270 + $0x68] sm:$0xff] %v683
          %700 = vst [vmem:[%s270 + $0x70] sm:$0xff] %v684
          %701 = vst [vmem:[%s270 + $0x78] sm:$0xff] %v685
        $region48: #{tpu_custom_call.1} parent=39 // pred_fallthru
          _
        %s702 = sand.u32 %s164, 1
        %s703 = scalar_lea.sflag [#allocation4], %s702
        %s704 = sand.u32 %s164, 1
        %s705 = smul.addr %s704, 128
        %s706 = scalar_lea.vmem [#allocation3], %s705
        // Predicated region
        $region49: #{tpu_custom_call.1} parent=39 // pred_check
          %p707 = pneg %p174
        $region50: #{tpu_custom_call.1} parent=39 // pred_check_branch
          %709 = sbr.rel (%p707) target = $region52
        $region51: #{tpu_custom_call.1} parent=39 // pred_region
          %s710 = smul.u32 16, %s23
          %712 = vsyncadd %s703, 0
          %s713 = smul.addr %s710, 8
          %s714 = scalar_lea.hbm %s5, %s713
          %s715 = sshll.u32 %s706, 4
          %s716 = int_to_ptr.vmem [resolvable:$true] %s715
          %s717 = sshll.u32 %s714, 4
          %s718 = int_to_ptr.hbm [resolvable:$true] %s717
          %723 = dma.vmem_to_hbm [thread:$0]  %s716, 2048, %s718, %s703, 128, 128, 8
        $region52: #{tpu_custom_call.1} parent=39 // pred_fallthru
          _
      $region40: #{tpu_custom_call.1} parent=5 // pred_fallthru
        _
      %p724 = scmp.le.s32.totalorder 2, %s14
      // Predicated region
      $region53: #{tpu_custom_call.1} parent=5 // pred_check
        %p725 = pneg %p724
      $region54: #{tpu_custom_call.1} parent=5 // pred_check_branch
        %727 = sbr.rel (%p725) target = $region56
      $region55: #{tpu_custom_call.1} parent=5 // pred_region
        %s728 = ssub.s32 %s14, 2
        // Predicated region
        $region57: #{tpu_custom_call.1} parent=55 // pred_check
          %p729 = pneg %p180
        $region58: #{tpu_custom_call.1} parent=55 // pred_check_branch
          %731 = sbr.rel (%p729) target = $region60
        $region59: #{tpu_custom_call.1} parent=55 // pred_region
          %s732 = sand.u32 %s165, 1
          %s733 = scalar_lea.sflag [#allocation4], %s732
          %s734 = sand.u32 %s165, 1
          %s735 = smul.addr %s734, 128
          %s736 = scalar_lea.vmem [#allocation3], %s735
          %738 = dma.done %s733, 2048
        $region60: #{tpu_custom_call.1} parent=55 // pred_fallthru
          _
      $region56: #{tpu_custom_call.1} parent=5 // pred_fallthru
        _
    $region6: #{tpu_custom_call.1} parent=1 // loop_footer
      %s18 = sadd.s32 1, %s14
    $region7: #{tpu_custom_call.1} parent=1 // loop_footer_branch
      %13 = sbr.rel target = $region3
    $region8: #{tpu_custom_call.1} parent=1 // loop_exit
      _
    %739 = vsyncpa [#allocation4], 1
    %s740 = scalar_lea.sflag [#allocation4], 1
    %741 = vsyncpa %s740, 1

</llo_original>
